<compile_context>
chip_gen: v5e
topology: v5e:2x2
jax: 0.10.0
libtpu: 0.0.40
codegen_flags: <defaults>
</compile_context>

<pallas_src>
import jax
import jax.numpy as jnp
from jax.experimental import pallas as pl
from jax.experimental.pallas import tpu as pltpu

LANE = 128  # TPU lane width; all packed tiles are lane-padded to this.


def _mlp_kernel(x_ref, w_ref, v_ref, out_ref):
    # x_ref : (TB, 128)  bf16  -- [ptx | core | mem | ncu | zero-pad]
    # w_ref : (272, 128) bf16  -- packed weight slab (see header comment)
    # v_ref : (8, 128)   f32   -- row 0: fused layer-1 bias, row 1: fc1 bias (+1.0 fold lane)
    # out_ref: (1, TB)   f32   -- lane-dense predictions
    x = x_ref[...]

    # Fused layer 1 (fc_ptx ++ fc_others via block-diagonal weight) + ReLU.
    h = jnp.dot(x, w_ref[0:LANE, :], preferred_element_type=jnp.float32)
    h = jnp.maximum(h + v_ref[0:1, :], 0.0)                 # (TB, 128), cols 64.. are 0

    # fc1 + ReLU (bias row carries a 1.0 in lane 127 that feeds the b2 fold).
    z = jnp.dot(h.astype(jnp.bfloat16), w_ref[LANE:2 * LANE, :],
                preferred_element_type=jnp.float32)
    z = jnp.maximum(z + v_ref[1:2, :], 0.0)                 # (TB, 128), lane 127 == 1.0

    # dropout: identity in eval mode.

    # fc2 (+ folded b2): lane-dense (1, TB) result straight from the MXU.
    zb = z.astype(jnp.bfloat16)
    out_ref[...] = jnp.dot(w_ref[2 * LANE:2 * LANE + 1, :], zb.T,
                           preferred_element_type=jnp.float32)


def pack_params(raw, ptx_dim, ncu_dim, hidden_dim):
    """Build kernel-ready packed params (one bf16 weight slab + one f32 bias
    slab, lane-padded to 128, b2 folded into the fc2 weight row).  Done once,
    outside the hot path."""
    other_dim = 2 + ncu_dim
    in_dim = ptx_dim + other_dim
    h, h2 = hidden_dim, 2 * hidden_dim
    assert in_dim <= LANE and h2 <= LANE and h < LANE - 1, "needs a free fold lane"

    # Fused layer-1 weight: block-diagonal [[Wptx^T, 0], [0, Woth^T]], padded.
    w01 = jnp.zeros((LANE, LANE), jnp.float32)
    w01 = w01.at[:ptx_dim, :h].set(raw["wptx_t"])
    w01 = w01.at[ptx_dim:in_dim, h:h2].set(raw["woth_t"])

    # fc1 weight, padded to a full 128x128 tile.
    w1 = jnp.zeros((LANE, LANE), jnp.float32)
    w1 = w1.at[:h2, :h].set(raw["w1_t"])

    # fc2 weight row; b2 folded into lane 127 (multiplies a constant 1.0).
    w2 = jnp.zeros((16, LANE), jnp.float32)          # 16 rows: bf16 sublane-tile aligned
    w2 = w2.at[0, :h].set(raw["w2_t"])
    w2 = w2.at[0, LANE - 1].set(raw["b2"][0])

    w_slab = jnp.concatenate([w01, w1, w2], axis=0).astype(jnp.bfloat16)  # (272, 128)

    # f32 bias slab.
    vec = jnp.zeros((8, LANE), jnp.float32)
    vec = vec.at[0, :h2].set(jnp.concatenate([raw["bptx"], raw["both"]]))
    vec = vec.at[1, :h].set(raw["b1"])
    vec = vec.at[1, LANE - 1].set(1.0)               # feeds the b2 fold lane

    return {"w_slab": w_slab, "vec_slab": vec, "in_dim": in_dim}


def _cost(n_rows, w_slab, vec_slab):
    flops = 2 * n_rows * (2 * LANE * LANE + LANE)
    bytes_accessed = (n_rows * LANE * 2                      # x (bf16)
                      + w_slab.size * w_slab.dtype.itemsize
                      + vec_slab.size * vec_slab.dtype.itemsize
                      + n_rows * 4)                          # out (f32)
    return pl.CostEstimate(flops=flops, transcendentals=0,
                           bytes_accessed=bytes_accessed)


def nvml_scaling_predictor_batched(ptx_vec, core_freq, mem_freq, ncu_metrics,
                                   packed, *, block_b=256):
    """Batched forward.  Inputs are (B, ptx_dim), (B, 1), (B, 1), (B, ncu_dim);
    returns (B, 1).  block_b: batch tile for the gridded path (use 128 on v5e)."""
    x = jnp.concatenate([ptx_vec, core_freq, mem_freq, ncu_metrics],
                        axis=1).astype(jnp.float32)
    B, in_dim = x.shape
    # Lane-pad features to 128 (matching zero rows in the packed layer-1 weight)
    # and cast to bf16 (matmul operands only; accumulation stays f32 in-kernel).
    x = jnp.pad(x, ((0, 0), (0, LANE - in_dim))).astype(jnp.bfloat16)

    w_slab, vec_slab = packed["w_slab"], packed["vec_slab"]
    vmem = pl.BlockSpec(memory_space=pltpu.MemorySpace.VMEM)

    if B <= block_b:
        # Small batch: single whole-array VMEM block, no grid (each grid step
        # would only add ~0.35 us of overhead at this size).
        out = pl.pallas_call(
            _mlp_kernel,
            out_shape=jax.ShapeDtypeStruct((1, B), jnp.float32),
            in_specs=[vmem, vmem, vmem],
            out_specs=vmem,
            cost_estimate=_cost(B, w_slab, vec_slab),
        )(x, w_slab, vec_slab)
        return out.reshape(B, 1)

    # Large batch: 1-D grid over batch tiles.  Weight/bias slabs use a constant
    # index_map so they stay VMEM-resident (no re-DMA per step); the parallel
    # batch axis shards across v7x's two TensorCores and lets Pallas
    # double-buffer the x / out DMAs behind compute.
    tb = block_b
    n_blk = pl.cdiv(B, tb)
    bp = n_blk * tb
    if bp != B:
        x = jnp.pad(x, ((0, bp - B), (0, 0)))
    out = pl.pallas_call(
        _mlp_kernel,
        out_shape=jax.ShapeDtypeStruct((1, bp), jnp.float32),
        grid=(n_blk,),
        in_specs=[
            pl.BlockSpec((tb, LANE), lambda i: (i, 0)),
            pl.BlockSpec(w_slab.shape, lambda i: (0, 0)),
            pl.BlockSpec(vec_slab.shape, lambda i: (0, 0)),
        ],
        out_specs=pl.BlockSpec((1, tb), lambda i: (0, i)),
        compiler_params=pltpu.CompilerParams(
            dimension_semantics=("parallel",)),
        cost_estimate=_cost(bp, w_slab, vec_slab),
    )(x, w_slab, vec_slab)
    return out[0, :B].reshape(B, 1)


def nvml_scaling_predictor(ptx_vec, core_freq, mem_freq, ncu_metrics, packed):
    """Single-sample forward matching the PyTorch module signature.
    1-D inputs; returns shape (1,)."""
    out = nvml_scaling_predictor_batched(
        ptx_vec.reshape(1, -1), core_freq.reshape(1, -1),
        mem_freq.reshape(1, -1), ncu_metrics.reshape(1, -1), packed)
    return out.reshape(1)


def init_params(key, ptx_dim, ncu_dim, hidden_dim):
    """Deterministic synthetic raw params; weights stored as (in, out) = W^T."""
    ks = jax.random.split(key, 8)
    s = 0.1
    return {
        "wptx_t": s * jax.random.normal(ks[0], (ptx_dim, hidden_dim), jnp.float32),
        "bptx":   s * jax.random.normal(ks[1], (hidden_dim,), jnp.float32),
        "woth_t": s * jax.random.normal(ks[2], (2 + ncu_dim, hidden_dim), jnp.float32),
        "both":   s * jax.random.normal(ks[3], (hidden_dim,), jnp.float32),
        "w1_t":   s * jax.random.normal(ks[4], (2 * hidden_dim, hidden_dim), jnp.float32),
        "b1":     s * jax.random.normal(ks[5], (hidden_dim,), jnp.float32),
        "w2_t":   s * jax.random.normal(ks[6], (hidden_dim,), jnp.float32),
        "b2":     s * jax.random.normal(ks[7], (1,), jnp.float32),
    }


def _reference(ptx_vec, core_freq, mem_freq, ncu_metrics, raw):
    """Pure-JAX single-sample reference following the PyTorch module structure,
    with the same bf16 quantization applied to the matmul operands as the kernel
    (biases stay f32 except b2, which the kernel stores in the bf16 slab)."""
    q = lambda a: a.astype(jnp.bfloat16).astype(jnp.float32)
    hi = jax.lax.Precision.HIGHEST
    other = jnp.concatenate([core_freq, mem_freq, ncu_metrics], axis=0)
    h_ptx = jax.nn.relu(jnp.dot(q(ptx_vec), q(raw["wptx_t"]), precision=hi) + raw["bptx"])
    h_oth = jax.nn.relu(jnp.dot(q(other), q(raw["woth_t"]), precision=hi) + raw["both"])
    comb = jnp.concatenate([h_ptx, h_oth], axis=0)
    x = jax.nn.relu(jnp.dot(q(comb), q(raw["w1_t"]), precision=hi) + raw["b1"])
    return (jnp.dot(q(x), q(raw["w2_t"]), precision=hi) + q(raw["b2"])).reshape(1)


if __name__ == "__main__":
    ptx_dim, ncu_dim, hidden_dim = 32, 14, 32

    key = jax.random.PRNGKey(0)
    k_in, k_p, k_b = jax.random.split(key, 3)

    raw = init_params(k_p, ptx_dim, ncu_dim, hidden_dim)
    packed = pack_params(raw, ptx_dim, ncu_dim, hidden_dim)

    # --- single-sample path (matches the PyTorch module's forward signature) ---
    ki = jax.random.split(k_in, 4)
    ptx_vec = jax.random.normal(ki[0], (ptx_dim,), jnp.float32)
    core_freq = jax.random.uniform(ki[1], (1,), jnp.float32, 0.5, 2.0)
    mem_freq = jax.random.uniform(ki[2], (1,), jnp.float32, 0.5, 2.0)
    ncu_metrics = jax.random.normal(ki[3], (ncu_dim,), jnp.float32)

    out = jax.block_until_ready(
        nvml_scaling_predictor(ptx_vec, core_freq, mem_freq, ncu_metrics, packed))
    ref = _reference(ptx_vec, core_freq, mem_freq, ncu_metrics, raw)
    assert out.shape == (1,)
    assert jnp.allclose(out, ref, atol=1e-4, rtol=1e-4), (out, ref)

    # --- small batch (no-grid path, amortizes launch / weight DMA) ---
    kb = jax.random.split(k_b, 8)
    B = 8
    ptx_b = jax.random.normal(kb[0], (B, ptx_dim), jnp.float32)
    cf_b = jax.random.uniform(kb[1], (B, 1), jnp.float32, 0.5, 2.0)
    mf_b = jax.random.uniform(kb[2], (B, 1), jnp.float32, 0.5, 2.0)
    ncu_b = jax.random.normal(kb[3], (B, ncu_dim), jnp.float32)

    out_b = jax.block_until_ready(
        nvml_scaling_predictor_batched(ptx_b, cf_b, mf_b, ncu_b, packed))
    ref_b = jax.vmap(lambda p, c, m, n: _reference(p, c, m, n, raw))(
        ptx_b, cf_b, mf_b, ncu_b)
    assert out_b.shape == (B, 1)
    assert jnp.allclose(out_b, ref_b.reshape(B, 1), atol=1e-4, rtol=1e-4)

    # --- large batch (gridded path: VMEM-resident weights, parallel batch axis) ---
    B2 = 512
    ptx_b2 = jax.random.normal(kb[4], (B2, ptx_dim), jnp.float32)
    cf_b2 = jax.random.uniform(kb[5], (B2, 1), jnp.float32, 0.5, 2.0)
    mf_b2 = jax.random.uniform(kb[6], (B2, 1), jnp.float32, 0.5, 2.0)
    ncu_b2 = jax.random.normal(kb[7], (B2, ncu_dim), jnp.float32)

    out_b2 = jax.block_until_ready(
        nvml_scaling_predictor_batched(ptx_b2, cf_b2, mf_b2, ncu_b2, packed,
                                       block_b=256))
    ref_b2 = jax.vmap(lambda p, c, m, n: _reference(p, c, m, n, raw))(
        ptx_b2, cf_b2, mf_b2, ncu_b2)
    assert out_b2.shape == (B2, 1)
    assert jnp.allclose(out_b2, ref_b2.reshape(B2, 1), atol=1e-4, rtol=1e-4)

    print("KERNEL_OK")
</pallas_src>

<mosaic_0001>
module attributes {stable_mosaic.version = 11 : i64} {
  func.func @_mlp_kernel(%arg0: memref<1x128xbf16, #tpu.memory_space<vmem>>, %arg1: memref<272x128xbf16, #tpu.memory_space<vmem>>, %arg2: memref<8x128xf32, #tpu.memory_space<vmem>>, %arg3: memref<1x1xf32, #tpu.memory_space<vmem>>) attributes {dimension_semantics = [], scalar_prefetch = 0 : i64, scratch_operands = 0 : i64, tpu.core_type = #tpu.core_type<tc>} {
    %c0 = arith.constant 0 : index
    %c0_0 = arith.constant 0 : index
    %0 = vector.load %arg0[%c0, %c0_0] : memref<1x128xbf16, #tpu.memory_space<vmem>>, vector<1x128xbf16>
    %c0_1 = arith.constant 0 : index
    %c0_2 = arith.constant 0 : index
    %1 = vector.load %arg1[%c0_1, %c0_2] : memref<272x128xbf16, #tpu.memory_space<vmem>>, vector<128x128xbf16>
    %cst = arith.constant dense<0.000000e+00> : vector<1x128xf32>
    %2 = tpu.matmul %0, %1, %cst {dimension_numbers = #tpu.dot_dimension_numbers<[1], [0], [0], [1], [0, 0, 1, 1], [], []>} : vector<1x128xbf16>, vector<128x128xbf16>, vector<1x128xf32> -> vector<1x128xf32>
    %c0_3 = arith.constant 0 : index
    %c0_4 = arith.constant 0 : index
    %3 = vector.load %arg2[%c0_3, %c0_4] : memref<8x128xf32, #tpu.memory_space<vmem>>, vector<1x128xf32>
    %4 = arith.addf %2, %3 : vector<1x128xf32>
    %cst_5 = arith.constant 0.000000e+00 : f32
    %5 = vector.broadcast %cst_5 : f32 to vector<1x128xf32>
    %6 = arith.maximumf %4, %5 : vector<1x128xf32>
    %7 = arith.truncf %6 : vector<1x128xf32> to vector<1x128xbf16>
    %c128 = arith.constant 128 : index
    %c0_6 = arith.constant 0 : index
    %8 = vector.load %arg1[%c128, %c0_6] : memref<272x128xbf16, #tpu.memory_space<vmem>>, vector<128x128xbf16>
    %cst_7 = arith.constant dense<0.000000e+00> : vector<1x128xf32>
    %9 = tpu.matmul %7, %8, %cst_7 {dimension_numbers = #tpu.dot_dimension_numbers<[1], [0], [0], [1], [0, 0, 1, 1], [], []>} : vector<1x128xbf16>, vector<128x128xbf16>, vector<1x128xf32> -> vector<1x128xf32>
    %c1 = arith.constant 1 : index
    %c0_8 = arith.constant 0 : index
    %10 = vector.load %arg2[%c1, %c0_8] : memref<8x128xf32, #tpu.memory_space<vmem>>, vector<1x128xf32>
    %11 = arith.addf %9, %10 : vector<1x128xf32>
    %cst_9 = arith.constant 0.000000e+00 : f32
    %12 = vector.broadcast %cst_9 : f32 to vector<1x128xf32>
    %13 = arith.maximumf %11, %12 : vector<1x128xf32>
    %14 = arith.truncf %13 : vector<1x128xf32> to vector<1x128xbf16>
    %c256 = arith.constant 256 : index
    %c0_10 = arith.constant 0 : index
    %15 = vector.load %arg1[%c256, %c0_10] : memref<272x128xbf16, #tpu.memory_space<vmem>>, vector<1x128xbf16>
    %16 = tpu.transpose %14, [1, 0] : vector<1x128xbf16> -> vector<128x1xbf16>
    %cst_11 = arith.constant dense<0.000000e+00> : vector<1x1xf32>
    %17 = tpu.matmul %15, %16, %cst_11 {dimension_numbers = #tpu.dot_dimension_numbers<[1], [0], [0], [1], [0, 0, 1, 1], [], []>} : vector<1x128xbf16>, vector<128x1xbf16>, vector<1x1xf32> -> vector<1x1xf32>
    %c0_12 = arith.constant 0 : index
    %c0_13 = arith.constant 0 : index
    %18 = vector.load %arg3[%c0_12, %c0_13] : memref<1x1xf32, #tpu.memory_space<vmem>>, vector<1x1xf32>
    tpu.vector_store %arg3[%c0_12, %c0_13], %17 {strides = array<i32>} : memref<1x1xf32, #tpu.memory_space<vmem>>, vector<1x1xf32>,
    return
  }
}

</mosaic_0001>

<llo_original>
// kernel: tpu_custom_call.1
$region0: #{tpu_custom_call.1}
  #allocation0 [shape = 'u32[]', space=smem, size = 0x4, offset = 0x4, fixed_abs, tag = 'smem constant byte address 0x4 - core index']
  #allocation1 [shape = 'u32[72,128]{1,0:T(1,128)}', space=vmem, size = 0x9000, scoped, tag = 'internal scratch']
  %s0 = inlined_call_operand.hbm [shape: bf16[1,128], index: 0, kind: input, shape index: {}]
  %s1 = inlined_call_operand.hbm [shape: bf16[272,128], index: 1, kind: input, shape index: {}]
  %s2 = inlined_call_operand.hbm [shape: f32[8,128], index: 2, kind: input, shape index: {}]
  %s3 = inlined_call_operand.hbm [shape: f32[1,1], index: 3, kind: output, shape index: {}]
  %s4 = sld [smem:[#allocation0]]
  $region34: #{tpu_custom_call.1} parent=0
    _
  %s6 = ssub.s32 1, %s4
  %s7 = scalar_select 0, %s6, %s4
  $region1: #{tpu_custom_call.1} parent=0
    #allocation2 [shape = 'u8[512]{0}', space=vmem, size = 0x400, scoped, tag = 'input window, operand 0, single buffered']
    #allocation3 [shape = 's32[1]{0}', space=sflag, size = 0x4, scoped, tag = 'scoped memory for tpu_custom_call.1']
    #allocation4 [shape = 's32[1]{0}', space=sflag, size = 0x4, scoped, tag = 'scoped memory for tpu_custom_call.1']
    #allocation5 [shape = 'u8[69632]{0}', space=vmem, size = 0x11000, scoped, tag = 'input window, operand 1, single buffered']
    #allocation6 [shape = 's32[1]{0}', space=sflag, size = 0x4, scoped, tag = 'scoped memory for tpu_custom_call.1']
    #allocation7 [shape = 'u8[4096]{0}', space=vmem, size = 0x1000, scoped, tag = 'input window, operand 2, single buffered']
    #allocation8 [shape = 'u8[512]{0}', space=vmem, size = 0x400, scoped, tag = 'output window, operand 0, single buffered']
    %8 = vsyncpa [#allocation3], 0
    %9 = vsyncpa [#allocation6], 0
    %10 = vsyncpa [#allocation4], 0
    // Predicated region
    $region2: #{tpu_custom_call.1} parent=1 // pred_check
      _
    $region3: #{tpu_custom_call.1} parent=1 // pred_check_branch
      %12 = sbr.rel (0) target = $region5
    $region4: #{tpu_custom_call.1} parent=1 // pred_region
      %14 = vsyncadd [#allocation3], 0
      %s16 = sshll.u32 %s0, 4
      %s17 = int_to_ptr.hbm [resolvable:$true] %s16
      %s18 = sshll.u32 [#allocation2], 4
      %s19 = int_to_ptr.vmem [resolvable:$true] %s18
      %21 = dma.hbm_to_vmem [thread:$0]  %s17, 16, %s19, [#allocation3]
    $region5: #{tpu_custom_call.1} parent=1 // pred_fallthru
      _
    // Predicated region
    $region6: #{tpu_custom_call.1} parent=1 // pred_check
      _
    $region7: #{tpu_custom_call.1} parent=1 // pred_check_branch
      %23 = sbr.rel (0) target = $region9
    $region8: #{tpu_custom_call.1} parent=1 // pred_region
      %25 = vsyncadd [#allocation6], 0
      %s26 = sshll.u32 %s1, 4
      %s27 = int_to_ptr.hbm [resolvable:$true] %s26
      %s28 = sshll.u32 [#allocation5], 4
      %s29 = int_to_ptr.vmem [resolvable:$true] %s28
      %34 = dma.hbm_to_vmem [thread:$0]  %s27, 2176, %s29, [#allocation6], 64, 64, 4
    $region9: #{tpu_custom_call.1} parent=1 // pred_fallthru
      _
    // Predicated region
    $region10: #{tpu_custom_call.1} parent=1 // pred_check
      _
    $region11: #{tpu_custom_call.1} parent=1 // pred_check_branch
      %36 = sbr.rel (0) target = $region13
    $region12: #{tpu_custom_call.1} parent=1 // pred_region
      %38 = vsyncadd [#allocation6], 0
      %s40 = sshll.u32 %s2, 4
      %s41 = int_to_ptr.hbm [resolvable:$true] %s40
      %s42 = sshll.u32 [#allocation7], 4
      %s43 = int_to_ptr.vmem [resolvable:$true] %s42
      %45 = dma.hbm_to_vmem [thread:$0]  %s41, 128, %s43, [#allocation6]
    $region13: #{tpu_custom_call.1} parent=1 // pred_fallthru
      _
    // Predicated region
    $region14: #{tpu_custom_call.1} parent=1 // pred_check
      _
    $region15: #{tpu_custom_call.1} parent=1 // pred_check_branch
      %47 = sbr.rel (0) target = $region17
    $region16: #{tpu_custom_call.1} parent=1 // pred_region
      %49 = dma.done [#allocation3], 16
    $region17: #{tpu_custom_call.1} parent=1 // pred_fallthru
      _
    // Predicated region
    $region18: #{tpu_custom_call.1} parent=1 // pred_check
      _
    $region19: #{tpu_custom_call.1} parent=1 // pred_check_branch
      %51 = sbr.rel (0) target = $region21
    $region20: #{tpu_custom_call.1} parent=1 // pred_region
      %53 = dma.done [#allocation6], 2176
    $region21: #{tpu_custom_call.1} parent=1 // pred_fallthru
      _
    // Predicated region
    $region22: #{tpu_custom_call.1} parent=1 // pred_check
      _
    $region23: #{tpu_custom_call.1} parent=1 // pred_check_branch
      %55 = sbr.rel (0) target = $region25
    $region24: #{tpu_custom_call.1} parent=1 // pred_region
      %57 = dma.done [#allocation6], 128
    $region25: #{tpu_custom_call.1} parent=1 // pred_fallthru
      _
    %v59 = vld [vmem:[#allocation2] sm:$0x1]
    %v60 = vld [vmem:[#allocation5] sm:$0xf]
    %v61 = vld [vmem:[#allocation5 + $0x4] sm:$0xf]
    %v62 = vld [vmem:[#allocation5 + $0x8] sm:$0xf]
    %v63 = vld [vmem:[#allocation5 + $0xc] sm:$0xf]
    %v64 = vld [vmem:[#allocation5 + $0x10] sm:$0xf]
    %v65 = vld [vmem:[#allocation5 + $0x14] sm:$0xf]
    %v66 = vld [vmem:[#allocation5 + $0x18] sm:$0xf]
    %v67 = vld [vmem:[#allocation5 + $0x1c] sm:$0xf]
    %v68 = vld [vmem:[#allocation5 + $0x20] sm:$0xf]
    %v69 = vld [vmem:[#allocation5 + $0x24] sm:$0xf]
    %v70 = vld [vmem:[#allocation5 + $0x28] sm:$0xf]
    %v71 = vld [vmem:[#allocation5 + $0x2c] sm:$0xf]
    %v72 = vld [vmem:[#allocation5 + $0x30] sm:$0xf]
    %v73 = vld [vmem:[#allocation5 + $0x34] sm:$0xf]
    %v74 = vld [vmem:[#allocation5 + $0x38] sm:$0xf]
    %v75 = vld [vmem:[#allocation5 + $0x3c] sm:$0xf]
    %v76 = vld [vmem:[#allocation7] sm:$0x1]
    %v93 = vunpack.c.l.b16 %v60
    %v94 = vunpack.c.l.b16 %v61
    %v95 = vunpack.c.l.b16 %v62
    %v96 = vunpack.c.l.b16 %v63
    %v97 = vunpack.c.l.b16 %v64
    %v98 = vunpack.c.l.b16 %v65
    %v99 = vunpack.c.l.b16 %v66
    %v100 = vunpack.c.l.b16 %v67
    %v101 = vunpack.c.l.b16 %v68
    %v102 = vunpack.c.l.b16 %v69
    %v103 = vunpack.c.l.b16 %v70
    %v104 = vunpack.c.l.b16 %v71
    %v105 = vunpack.c.l.b16 %v72
    %v106 = vunpack.c.l.b16 %v73
    %v107 = vunpack.c.l.b16 %v74
    %v108 = vunpack.c.l.b16 %v75
    %v109 = vpack.c.b16 %v94, %v93
    %v110 = vpack.c.b16 %v96, %v95
    %v111 = vpack.c.b16 %v98, %v97
    %v112 = vpack.c.b16 %v100, %v99
    %v113 = vpack.c.b16 %v102, %v101
    %v114 = vpack.c.b16 %v104, %v103
    %v115 = vpack.c.b16 %v106, %v105
    %v116 = vpack.c.b16 %v108, %v107
    %125 = vmatpush.bf16.msra.mxu0 %v116
    %126 = vmatpush.bf16.msra.mxu0 %v115
    %127 = vmatpush.bf16.msra.mxu0 %v114
    %128 = vmatpush.bf16.msra.mxu0 %v113
    %129 = vmatpush.bf16.msra.mxu0 %v112
    %130 = vmatpush.bf16.msra.mxu0 %v111
    %131 = vmatpush.bf16.msra.mxu0 %v110
    %132 = vmatpush.bf16.msra.mxu0 %v109
    %133 = vmatmul.bf16.gmra.mxu0 %v59
    %v134 = vpop.f32.mrf.mxu0
    %v135 = vadd.f32 %v76, %v134
    %v136 = vpop.f32.mrf.mxu0
    %137 = vdwg.mxu0
    %v138 = vmax.f32 %v135, 0.0
    %v139 = vpack.c.bf16 %v138, %v138
    %v140 = vld [vmem:[#allocation5 + $0x40] sm:$0xf]
    %v141 = vld [vmem:[#allocation5 + $0x44] sm:$0xf]
    %v142 = vld [vmem:[#allocation5 + $0x48] sm:$0xf]
    %v143 = vld [vmem:[#allocation5 + $0x4c] sm:$0xf]
    %v144 = vld [vmem:[#allocation5 + $0x50] sm:$0xf]
    %v145 = vld [vmem:[#allocation5 + $0x54] sm:$0xf]
    %v146 = vld [vmem:[#allocation5 + $0x58] sm:$0xf]
    %v147 = vld [vmem:[#allocation5 + $0x5c] sm:$0xf]
    %v148 = vld [vmem:[#allocation5 + $0x60] sm:$0xf]
    %v149 = vld [vmem:[#allocation5 + $0x64] sm:$0xf]
    %v150 = vld [vmem:[#allocation5 + $0x68] sm:$0xf]
    %v151 = vld [vmem:[#allocation5 + $0x6c] sm:$0xf]
    %v152 = vld [vmem:[#allocation5 + $0x70] sm:$0xf]
    %v153 = vld [vmem:[#allocation5 + $0x74] sm:$0xf]
    %v154 = vld [vmem:[#allocation5 + $0x78] sm:$0xf]
    %v155 = vld [vmem:[#allocation5 + $0x7c] sm:$0xf]
    %v156 = vld [vmem:[#allocation7 + $0x1] sm:$0x1]
    %v173 = vunpack.c.l.b16 %v140
    %v174 = vunpack.c.l.b16 %v141
    %v175 = vunpack.c.l.b16 %v142
    %v176 = vunpack.c.l.b16 %v143
    %v177 = vunpack.c.l.b16 %v144
    %v178 = vunpack.c.l.b16 %v145
    %v179 = vunpack.c.l.b16 %v146
    %v180 = vunpack.c.l.b16 %v147
    %v181 = vunpack.c.l.b16 %v148
    %v182 = vunpack.c.l.b16 %v149
    %v183 = vunpack.c.l.b16 %v150
    %v184 = vunpack.c.l.b16 %v151
    %v185 = vunpack.c.l.b16 %v152
    %v186 = vunpack.c.l.b16 %v153
    %v187 = vunpack.c.l.b16 %v154
    %v188 = vunpack.c.l.b16 %v155
    %v189 = vpack.c.b16 %v174, %v173
    %v190 = vpack.c.b16 %v176, %v175
    %v191 = vpack.c.b16 %v178, %v177
    %v192 = vpack.c.b16 %v180, %v179
    %v193 = vpack.c.b16 %v182, %v181
    %v194 = vpack.c.b16 %v184, %v183
    %v195 = vpack.c.b16 %v186, %v185
    %v196 = vpack.c.b16 %v188, %v187
    %205 = vmatpush.bf16.msra.mxu0 %v196
    %206 = vmatpush.bf16.msra.mxu0 %v195
    %207 = vmatpush.bf16.msra.mxu0 %v194
    %208 = vmatpush.bf16.msra.mxu0 %v193
    %209 = vmatpush.bf16.msra.mxu0 %v192
    %210 = vmatpush.bf16.msra.mxu0 %v191
    %211 = vmatpush.bf16.msra.mxu0 %v190
    %212 = vmatpush.bf16.msra.mxu0 %v189
    %213 = vmatmul.bf16.gmra.mxu0 %v139
    %v214 = vpop.f32.mrf.mxu0
    %v215 = vadd.f32 %v156, %v214
    %v216 = vpop.f32.mrf.mxu0
    %217 = vdwg.mxu0
    %v218 = vmax.f32 %v215, 0.0
    %v219 = vpack.c.bf16 %v218, %v218
    %v220 = vld [vmem:[#allocation5 + $0x80] sm:$0x1]
    %221 = vmatpush.bf16.xpose.msra.mxu0 0
    %222 = vmatpush.bf16.xpose.msra.mxu0 0
    %223 = vmatpush.bf16.xpose.msra.mxu0 0
    %224 = vmatpush.bf16.xpose.msra.mxu0 0
    %225 = vmatpush.bf16.xpose.msra.mxu0 0
    %226 = vmatpush.bf16.xpose.msra.mxu0 0
    %227 = vmatpush.bf16.xpose.msra.mxu0 0
    %228 = vmatpush.bf16.xpose.msra.mxu0 %v219
    %229 = vmatmul.bf16.gmra.mxu0 %v220
    %v230 = vpop.f32.mrf.mxu0
    %v231 = vadd.f32 0.0, %v230
    %v232 = vpop.f32.mrf.mxu0
    %233 = vdwg.mxu0
    %vm234 = vcmask 0
    %235 = vst.msk [vmem:[#allocation8] sm:$0x1] %vm234, %v231
    // Predicated region
    $region26: #{tpu_custom_call.1} parent=1 // pred_check
      _
    $region27: #{tpu_custom_call.1} parent=1 // pred_check_branch
      %237 = sbr.rel (0) target = $region29
    $region28: #{tpu_custom_call.1} parent=1 // pred_region
      %239 = vsyncadd [#allocation4], 0
      %s241 = sshll.u32 [#allocation8], 4
      %s242 = int_to_ptr.vmem [resolvable:$true] %s241
      %s243 = sshll.u32 %s3, 4
      %s244 = int_to_ptr.hbm [resolvable:$true] %s243
      %246 = dma.vmem_to_hbm [thread:$0]  %s242, 16, %s244, [#allocation4]
    $region29: #{tpu_custom_call.1} parent=1 // pred_fallthru
      _
    // Predicated region
    $region30: #{tpu_custom_call.1} parent=1 // pred_check
      _
    $region31: #{tpu_custom_call.1} parent=1 // pred_check_branch
      %248 = sbr.rel (0) target = $region33
    $region32: #{tpu_custom_call.1} parent=1 // pred_region
      %250 = dma.done [#allocation4], 16
    $region33: #{tpu_custom_call.1} parent=1 // pred_fallthru
      _
    %251 = vsyncpa [#allocation3], 1
    %252 = vsyncpa [#allocation6], 1
    %253 = vsyncpa [#allocation4], 1

</llo_original>
